<compile_context>
chip_gen: v5e
topology: v5e:2x2
jax: 0.10.0
libtpu: 0.0.40
codegen_flags: <defaults>
</compile_context>

<pallas_src>
import functools

import jax
import jax.numpy as jnp
from jax.experimental import pallas as pl
from jax.experimental.pallas import tpu as pltpu


def _round_up(x, m):
    return ((x + m - 1) // m) * m


def _cdiv(a, b):
    return (a + b - 1) // b


def _leaky_relu(x, slope=0.1):
    # slope matches nn.LeakyReLU(0.1) in the PyTorch module.
    # mul + max (2 VALU ops) instead of cmp + mul + select (3).
    return jnp.maximum(x, slope * x)


def cond_mlp_kernel(x_ref,
                    w1_ref, b1_ref,
                    w2_ref, b2_ref,
                    w3_ref, b3_ref,
                    w4_ref, b4_ref,
                    o_ref,
                    h3_ref):
    """One (batch-tile, output-column-tile) grid step of the CondMLP forward."""
    col = pl.program_id(1)
    cd = w1_ref.dtype   # MXU input dtype (bf16 or f32); accumulation is f32.

    # Layers 1-3 depend only on the batch tile: compute them once per batch
    # tile (col == 0) and keep the activation resident in VMEM scratch for all
    # output-column tiles.
    @pl.when(col == 0)
    def _():
        h = jnp.dot(x_ref[...], w1_ref[...],
                    preferred_element_type=jnp.float32) + b1_ref[...]
        h = _leaky_relu(h)
        h = jnp.dot(h.astype(cd), w2_ref[...],
                    preferred_element_type=jnp.float32) + b2_ref[...]
        h = _leaky_relu(h)
        h = jnp.dot(h.astype(cd), w3_ref[...],
                    preferred_element_type=jnp.float32) + b3_ref[...]
        h = _leaky_relu(h)
        h3_ref[...] = h.astype(h3_ref.dtype)

    # Layer 4: lane-dense, 128-padded output column tile (unmasked stores).
    out = jnp.dot(h3_ref[...], w4_ref[...],
                  preferred_element_type=jnp.float32) + b4_ref[...]
    o_ref[...] = out.astype(o_ref.dtype)


def cond_mlp_forward(X_q, noise, params, *,
                     tm_target=1024, tn_target=1024,
                     use_bf16=None, out_dtype=jnp.float32):
    """Pallas implementation of CondMLP.forward.

    Args:
      X_q:   [B, cond_len] float32
      noise: [B, seed_dim] float32
      params: dict with w1..w4 ([in, out]) and b1..b4 ([1, out]) in float32
      tm_target: target batch tile size (actual tile derived from B)
      tn_target: target output-column tile size (for very large seq_len)
      use_bf16: None = auto (bf16 matmuls iff hidden_dim >= 128)
      out_dtype: dtype of the returned array (float32 by default)

    Returns:
      [B, seq_len - cond_len] array of dtype `out_dtype`.
    """
    B, d_q = X_q.shape
    _, d_n = noise.shape
    d_in = d_q + d_n
    H = params["w1"].shape[1]
    D_out = params["w4"].shape[1]

    if use_bf16 is None:
        # Tiny hidden dims never saturate the MXU; bf16 casts are pure VPU
        # overhead there, so keep everything f32.
        use_bf16 = H >= 128
    compute_dtype = jnp.bfloat16 if use_bf16 else jnp.float32
    row_align = 16 if use_bf16 else 8

    # --- Batch tiling: derive tm from B (caps padding waste). --------------
    n_row = max(1, _cdiv(B, tm_target))
    if n_row == 1 and B >= 32:
        n_row = 2          # v7x megacore: give both TensorCores a step.
    tm = _round_up(_cdiv(B, n_row), row_align)
    B_pad = n_row * tm

    # --- Output column tiling (lane-dense 128-padded tiles). ---------------
    n_col = max(1, _cdiv(_round_up(D_out, 128), tn_target))
    tn = _round_up(_cdiv(D_out, n_col), 128)
    D_out_pad = n_col * tn
    col_pad = D_out_pad - D_out

    # --- Input: fused concat + pre-cast to compute dtype, batch-padded. ----
    x = jnp.concatenate([X_q, noise], axis=1).astype(compute_dtype)
    if B_pad != B:
        x = jnp.pad(x, ((0, B_pad - B), (0, 0)))

    # --- Weights / biases (weights in compute dtype, biases in f32). -------
    w1 = params["w1"].astype(compute_dtype)
    b1 = params["b1"].astype(jnp.float32)
    w2 = params["w2"].astype(compute_dtype)
    b2 = params["b2"].astype(jnp.float32)
    w3 = params["w3"].astype(compute_dtype)
    b3 = params["b3"].astype(jnp.float32)
    w4 = jnp.pad(params["w4"], ((0, 0), (0, col_pad))).astype(compute_dtype)
    b4 = jnp.pad(params["b4"], ((0, 0), (0, col_pad))).astype(jnp.float32)

    grid = (n_row, n_col)

    def const_spec(shape):
        # Whole-array block, constant across the grid (fetched once).
        return pl.BlockSpec(shape, lambda i, j: (0,) * len(shape))

    # --- VMEM budget -> explicit limit, capped vs. the device's capacity. --
    bpe = jnp.dtype(compute_dtype).itemsize
    obpe = jnp.dtype(out_dtype).itemsize
    in_tile = 2 * tm * d_in * bpe                                  # dbl-buffered input tile
    out_tile = 2 * tm * tn * obpe                                  # dbl-buffered output tile
    w_bytes = 2 * (bpe * (d_in * H + 2 * H * H + H * tn)
                   + 4 * (3 * H + tn))                             # dbl-buffered params
    scratch = tm * H * bpe                                         # resident h3
    act = 4 * tm * max(H, tn) * 4                                  # live f32 intermediates + slack
    budget = in_tile + out_tile + w_bytes + scratch + act
    try:
        vmem_cap = int(getattr(pltpu.get_tpu_info(),
                               "vmem_capacity_bytes", 64 * 2 ** 20))
    except Exception:  # pragma: no cover - conservative fallback
        vmem_cap = 64 * 2 ** 20
    cap = max(16 * 2 ** 20, int(0.72 * vmem_cap))
    vmem_limit = int(min(max(2 * budget, 16 * 2 ** 20), cap))

    out = pl.pallas_call(
        cond_mlp_kernel,
        out_shape=jax.ShapeDtypeStruct((B_pad, D_out_pad), out_dtype),
        grid_spec=pltpu.PrefetchScalarGridSpec(
            num_scalar_prefetch=0,
            grid=grid,
            in_specs=[
                pl.BlockSpec((tm, d_in), lambda i, j: (i, 0)),   # (X_q|noise) tile
                const_spec(w1.shape), const_spec(b1.shape),
                const_spec(w2.shape), const_spec(b2.shape),
                const_spec(w3.shape), const_spec(b3.shape),
                pl.BlockSpec((H, tn), lambda i, j: (0, j)),      # w4 column tile
                pl.BlockSpec((1, tn), lambda i, j: (0, j)),      # b4 column tile
            ],
            out_specs=pl.BlockSpec((tm, tn), lambda i, j: (i, j)),
            scratch_shapes=[pltpu.VMEM((tm, H), compute_dtype)],  # resident h3
        ),
        compiler_params=pltpu.CompilerParams(
            # batch axis shards across v7x's 2 TCs; col axis carries the
            # h3 scratch dependency -> arbitrary.
            dimension_semantics=("parallel", "arbitrary"),
            vmem_limit_bytes=vmem_limit,
        ),
    )(x, w1, b1, w2, b2, w3, b3, w4, b4)

    return out[:B, :D_out]


def init_cond_mlp_params(key, seed_dim, cond_len, seq_len, hidden_dim=256):
    """Deterministic parameter init (shapes mirror the PyTorch module)."""
    d_in = seed_dim + cond_len
    d_out = seq_len - cond_len
    dims = [(d_in, hidden_dim), (hidden_dim, hidden_dim),
            (hidden_dim, hidden_dim), (hidden_dim, d_out)]
    params = {}
    for idx, (din, dout) in enumerate(dims, start=1):
        key, kw, kb = jax.random.split(key, 3)
        bound = 1.0 / float(jnp.sqrt(din))
        params[f"w{idx}"] = jax.random.uniform(
            kw, (din, dout), jnp.float32, -bound, bound)
        params[f"b{idx}"] = jax.random.uniform(
            kb, (1, dout), jnp.float32, -bound, bound)
    return params


def cond_mlp_reference(X_q, noise, params):
    """Pure-JAX f32 reference of the same forward pass."""
    h = jnp.concatenate([X_q, noise], axis=1)
    for idx in range(1, 4):
        h = h @ params[f"w{idx}"] + params[f"b{idx}"]
        h = jnp.where(h > 0, h, 0.1 * h)
    return h @ params["w4"] + params["b4"]


def _run_case(key, B, seed_dim, cond_len, seq_len, hidden_dim, tol):
    k_params, k_x, k_n = jax.random.split(key, 3)
    params = init_cond_mlp_params(k_params, seed_dim, cond_len, seq_len,
                                  hidden_dim)
    X_q = jax.random.normal(k_x, (B, cond_len), jnp.float32)
    noise = jax.random.normal(k_n, (B, seed_dim), jnp.float32)

    fwd = jax.jit(functools.partial(cond_mlp_forward))
    out = jax.block_until_ready(fwd(X_q, noise, params))

    ref = cond_mlp_reference(X_q, noise, params)
    assert out.shape == (B, seq_len - cond_len), out.shape
    max_diff = float(jnp.max(jnp.abs(out - ref)))
    assert jnp.allclose(out, ref, atol=tol, rtol=tol), \
        f"mismatch vs reference, max abs diff {max_diff}"
    return max_diff


if __name__ == "__main__":
    k1, k2 = jax.random.split(jax.random.PRNGKey(0))

    # Case 1 (spec-sized small shapes): batch=16, q=4, seed_dim=4, p=12, H=32.
    # Auto-selects the f32 path (H < 128), grid (1, 1), tm=16.
    _run_case(k1, B=16, seed_dim=4, cond_len=4, seq_len=12, hidden_dim=32,
              tol=3e-2)

    # Case 2: exercises bf16 MXU path, >=2-step grid (megacore) and column
    # padding: batch=48, q=8, seed_dim=8, p=72, H=256 (module default).
    _run_case(k2, B=48, seed_dim=8, cond_len=8, seq_len=72, hidden_dim=256,
              tol=1e-1)

    print("KERNEL_OK")
</pallas_src>

<mosaic_0001>
module attributes {stable_mosaic.version = 11 : i64} {
  func.func @cond_mlp_kernel(%arg0: i32, %arg1: i32, %arg2: memref<16x8xf32, #tpu.memory_space<vmem>>, %arg3: memref<8x32xf32, #tpu.memory_space<vmem>>, %arg4: memref<1x32xf32, #tpu.memory_space<vmem>>, %arg5: memref<32x32xf32, #tpu.memory_space<vmem>>, %arg6: memref<1x32xf32, #tpu.memory_space<vmem>>, %arg7: memref<32x32xf32, #tpu.memory_space<vmem>>, %arg8: memref<1x32xf32, #tpu.memory_space<vmem>>, %arg9: memref<32x128xf32, #tpu.memory_space<vmem>>, %arg10: memref<1x128xf32, #tpu.memory_space<vmem>>, %arg11: memref<16x128xf32, #tpu.memory_space<vmem>>, %arg12: memref<16x32xf32, #tpu.memory_space<vmem>>) attributes {dimension_semantics = [#tpu.dimension_semantics<parallel>, #tpu.dimension_semantics<arbitrary>], iteration_bounds = array<i64: 1, 1>, scalar_prefetch = 0 : i64, scratch_operands = 1 : i64, tpu.core_type = #tpu.core_type<tc>, window_params = [{transform_indices = @transform_0, window_bounds = array<i64: 16, 8>}, {pipeline_mode = #tpu.pipeline_mode<synchronous>, transform_indices = @transform_1, window_bounds = array<i64: 8, 32>}, {pipeline_mode = #tpu.pipeline_mode<synchronous>, transform_indices = @transform_2, window_bounds = array<i64: 1, 32>}, {pipeline_mode = #tpu.pipeline_mode<synchronous>, transform_indices = @transform_3, window_bounds = array<i64: 32, 32>}, {pipeline_mode = #tpu.pipeline_mode<synchronous>, transform_indices = @transform_4, window_bounds = array<i64: 1, 32>}, {pipeline_mode = #tpu.pipeline_mode<synchronous>, transform_indices = @transform_5, window_bounds = array<i64: 32, 32>}, {pipeline_mode = #tpu.pipeline_mode<synchronous>, transform_indices = @transform_6, window_bounds = array<i64: 1, 32>}, {transform_indices = @transform_7, window_bounds = array<i64: 32, 128>}, {transform_indices = @transform_8, window_bounds = array<i64: 1, 128>}, {transform_indices = @transform_9, window_bounds = array<i64: 16, 128>}]} {
    %c0_i32 = arith.constant 0 : i32
    %0 = arith.cmpi eq, %arg1, %c0_i32 : i32
    %1 = arith.extui %0 : i1 to i32
    %c0_i32_0 = arith.constant 0 : i32
    %2 = arith.cmpi ne, %1, %c0_i32_0 : i32
    scf.if %2 {
      %c0_8 = arith.constant 0 : index
      %c0_9 = arith.constant 0 : index
      %10 = vector.load %arg2[%c0_8, %c0_9] : memref<16x8xf32, #tpu.memory_space<vmem>>, vector<16x8xf32>
      %c0_10 = arith.constant 0 : index
      %c0_11 = arith.constant 0 : index
      %11 = vector.load %arg3[%c0_10, %c0_11] : memref<8x32xf32, #tpu.memory_space<vmem>>, vector<8x32xf32>
      %cst_12 = arith.constant dense<0.000000e+00> : vector<16x32xf32>
      %12 = tpu.matmul %10, %11, %cst_12 {dimension_numbers = #tpu.dot_dimension_numbers<[1], [0], [0], [1], [0, 0, 1, 1], [], []>} : vector<16x8xf32>, vector<8x32xf32>, vector<16x32xf32> -> vector<16x32xf32>
      %c0_13 = arith.constant 0 : index
      %c0_14 = arith.constant 0 : index
      %13 = vector.load %arg4[%c0_13, %c0_14] : memref<1x32xf32, #tpu.memory_space<vmem>>, vector<1x32xf32>
      %14 = vector.broadcast %13 : vector<1x32xf32> to vector<16x32xf32>
      %15 = arith.addf %12, %14 : vector<16x32xf32>
      %cst_15 = arith.constant 1.000000e-01 : f32
      %16 = vector.broadcast %cst_15 : f32 to vector<16x32xf32>
      %17 = arith.mulf %16, %15 : vector<16x32xf32>
      %18 = arith.maximumf %15, %17 : vector<16x32xf32>
      %c0_16 = arith.constant 0 : index
      %c0_17 = arith.constant 0 : index
      %19 = vector.load %arg5[%c0_16, %c0_17] : memref<32x32xf32, #tpu.memory_space<vmem>>, vector<32x32xf32>
      %cst_18 = arith.constant dense<0.000000e+00> : vector<16x32xf32>
      %20 = tpu.matmul %18, %19, %cst_18 {dimension_numbers = #tpu.dot_dimension_numbers<[1], [0], [0], [1], [0, 0, 1, 1], [], []>} : vector<16x32xf32>, vector<32x32xf32>, vector<16x32xf32> -> vector<16x32xf32>
      %c0_19 = arith.constant 0 : index
      %c0_20 = arith.constant 0 : index
      %21 = vector.load %arg6[%c0_19, %c0_20] : memref<1x32xf32, #tpu.memory_space<vmem>>, vector<1x32xf32>
      %22 = vector.broadcast %21 : vector<1x32xf32> to vector<16x32xf32>
      %23 = arith.addf %20, %22 : vector<16x32xf32>
      %cst_21 = arith.constant 1.000000e-01 : f32
      %24 = vector.broadcast %cst_21 : f32 to vector<16x32xf32>
      %25 = arith.mulf %24, %23 : vector<16x32xf32>
      %26 = arith.maximumf %23, %25 : vector<16x32xf32>
      %c0_22 = arith.constant 0 : index
      %c0_23 = arith.constant 0 : index
      %27 = vector.load %arg7[%c0_22, %c0_23] : memref<32x32xf32, #tpu.memory_space<vmem>>, vector<32x32xf32>
      %cst_24 = arith.constant dense<0.000000e+00> : vector<16x32xf32>
      %28 = tpu.matmul %26, %27, %cst_24 {dimension_numbers = #tpu.dot_dimension_numbers<[1], [0], [0], [1], [0, 0, 1, 1], [], []>} : vector<16x32xf32>, vector<32x32xf32>, vector<16x32xf32> -> vector<16x32xf32>
      %c0_25 = arith.constant 0 : index
      %c0_26 = arith.constant 0 : index
      %29 = vector.load %arg8[%c0_25, %c0_26] : memref<1x32xf32, #tpu.memory_space<vmem>>, vector<1x32xf32>
      %30 = vector.broadcast %29 : vector<1x32xf32> to vector<16x32xf32>
      %31 = arith.addf %28, %30 : vector<16x32xf32>
      %cst_27 = arith.constant 1.000000e-01 : f32
      %32 = vector.broadcast %cst_27 : f32 to vector<16x32xf32>
      %33 = arith.mulf %32, %31 : vector<16x32xf32>
      %34 = arith.maximumf %31, %33 : vector<16x32xf32>
      %c0_28 = arith.constant 0 : index
      %c0_29 = arith.constant 0 : index
      %35 = vector.load %arg12[%c0_28, %c0_29] : memref<16x32xf32, #tpu.memory_space<vmem>>, vector<16x32xf32>
      tpu.vector_store %arg12[%c0_28, %c0_29], %34 {strides = array<i32>} : memref<16x32xf32, #tpu.memory_space<vmem>>, vector<16x32xf32>,
    } else {
    }
    %c0 = arith.constant 0 : index
    %c0_1 = arith.constant 0 : index
    %3 = vector.load %arg12[%c0, %c0_1] : memref<16x32xf32, #tpu.memory_space<vmem>>, vector<16x32xf32>
    %c0_2 = arith.constant 0 : index
    %c0_3 = arith.constant 0 : index
    %4 = vector.load %arg9[%c0_2, %c0_3] : memref<32x128xf32, #tpu.memory_space<vmem>>, vector<32x128xf32>
    %cst = arith.constant dense<0.000000e+00> : vector<16x128xf32>
    %5 = tpu.matmul %3, %4, %cst {dimension_numbers = #tpu.dot_dimension_numbers<[1], [0], [0], [1], [0, 0, 1, 1], [], []>} : vector<16x32xf32>, vector<32x128xf32>, vector<16x128xf32> -> vector<16x128xf32>
    %c0_4 = arith.constant 0 : index
    %c0_5 = arith.constant 0 : index
    %6 = vector.load %arg10[%c0_4, %c0_5] : memref<1x128xf32, #tpu.memory_space<vmem>>, vector<1x128xf32>
    %7 = vector.broadcast %6 : vector<1x128xf32> to vector<16x128xf32>
    %8 = arith.addf %5, %7 : vector<16x128xf32>
    %c0_6 = arith.constant 0 : index
    %c0_7 = arith.constant 0 : index
    %9 = vector.load %arg11[%c0_6, %c0_7] : memref<16x128xf32, #tpu.memory_space<vmem>>, vector<16x128xf32>
    tpu.vector_store %arg11[%c0_6, %c0_7], %8 {strides = array<i32>} : memref<16x128xf32, #tpu.memory_space<vmem>>, vector<16x128xf32>,
    return
  }
  func.func @transform_0(%arg0: i32, %arg1: i32) -> (i32, i32) {
    %c0_i32 = arith.constant 0 : i32
    %c0_i32_0 = arith.constant 0 : i32
    return %arg0, %c0_i32 : i32, i32
  }
  func.func @transform_1(%arg0: i32, %arg1: i32) -> (i32, i32) {
    %c0_i32 = arith.constant 0 : i32
    %c0_i32_0 = arith.constant 0 : i32
    %c0_i32_1 = arith.constant 0 : i32
    return %c0_i32, %c0_i32_0 : i32, i32
  }
  func.func @transform_2(%arg0: i32, %arg1: i32) -> (i32, i32) {
    %c0_i32 = arith.constant 0 : i32
    %c0_i32_0 = arith.constant 0 : i32
    %c0_i32_1 = arith.constant 0 : i32
    return %c0_i32, %c0_i32_0 : i32, i32
  }
  func.func @transform_3(%arg0: i32, %arg1: i32) -> (i32, i32) {
    %c0_i32 = arith.constant 0 : i32
    %c0_i32_0 = arith.constant 0 : i32
    %c0_i32_1 = arith.constant 0 : i32
    return %c0_i32, %c0_i32_0 : i32, i32
  }
  func.func @transform_4(%arg0: i32, %arg1: i32) -> (i32, i32) {
    %c0_i32 = arith.constant 0 : i32
    %c0_i32_0 = arith.constant 0 : i32
    %c0_i32_1 = arith.constant 0 : i32
    return %c0_i32, %c0_i32_0 : i32, i32
  }
  func.func @transform_5(%arg0: i32, %arg1: i32) -> (i32, i32) {
    %c0_i32 = arith.constant 0 : i32
    %c0_i32_0 = arith.constant 0 : i32
    %c0_i32_1 = arith.constant 0 : i32
    return %c0_i32, %c0_i32_0 : i32, i32
  }
  func.func @transform_6(%arg0: i32, %arg1: i32) -> (i32, i32) {
    %c0_i32 = arith.constant 0 : i32
    %c0_i32_0 = arith.constant 0 : i32
    %c0_i32_1 = arith.constant 0 : i32
    return %c0_i32, %c0_i32_0 : i32, i32
  }
  func.func @transform_7(%arg0: i32, %arg1: i32) -> (i32, i32) {
    %c0_i32 = arith.constant 0 : i32
    %c0_i32_0 = arith.constant 0 : i32
    return %c0_i32, %arg1 : i32, i32
  }
  func.func @transform_8(%arg0: i32, %arg1: i32) -> (i32, i32) {
    %c0_i32 = arith.constant 0 : i32
    %c0_i32_0 = arith.constant 0 : i32
    return %c0_i32, %arg1 : i32, i32
  }
  func.func @transform_9(%arg0: i32, %arg1: i32) -> (i32, i32) {
    %c0_i32 = arith.constant 0 : i32
    return %arg0, %arg1 : i32, i32
  }
}

</mosaic_0001>

<llo_original>
// kernel: cond_mlp_forward.1
$region0: #{cond_mlp_forward.1}
  #allocation0 [shape = 'u32[]', space=smem, size = 0x4, offset = 0x4, fixed_abs, tag = 'smem constant byte address 0x4 - core index']
  #allocation1 [shape = 'u32[72,128]{1,0:T(1,128)}', space=vmem, size = 0x9000, scoped, tag = 'internal scratch']
  #allocation2 [shape = 'f32[16,32]{1,0:T(8,128)}', space=vmem, size = 0x2000, scoped, tag = 'scratch operand']
  %s0 = inlined_call_operand.vmem [shape: f32[16,8], index: 0, kind: input, shape index: {}]
  %s1 = inlined_call_operand.vmem [shape: f32[8,32], index: 1, kind: input, shape index: {}]
  %s2 = inlined_call_operand.vmem [shape: f32[1,32], index: 2, kind: input, shape index: {}]
  %s3 = inlined_call_operand.vmem [shape: f32[32,32], index: 3, kind: input, shape index: {}]
  %s4 = inlined_call_operand.vmem [shape: f32[1,32], index: 4, kind: input, shape index: {}]
  %s5 = inlined_call_operand.vmem [shape: f32[32,32], index: 5, kind: input, shape index: {}]
  %s6 = inlined_call_operand.vmem [shape: f32[1,32], index: 6, kind: input, shape index: {}]
  %s7 = inlined_call_operand.vmem [shape: f32[32,128], index: 7, kind: input, shape index: {}]
  %s8 = inlined_call_operand.vmem [shape: f32[1,128], index: 8, kind: input, shape index: {}]
  %s9 = inlined_call_operand.vmem [shape: f32[16,128], index: 9, kind: output, shape index: {}]
  %s10 = sld [smem:[#allocation0]]
  $region50: #{cond_mlp_forward.1} parent=0
    _
  %s12 = ssub.s32 1, %s10
  %s13 = scalar_select 0, %s12, %s10
  // Predicated region
  $region2: #{cond_mlp_forward.1} parent=0 // pred_check
    _
  $region3: #{cond_mlp_forward.1} parent=0 // pred_check_branch
    %15 = sbr.rel (0) target = $region5
  $region4: #{cond_mlp_forward.1} parent=0 // pred_region
    _
  $region5: #{cond_mlp_forward.1} parent=0 // pred_fallthru
    _
  // Predicated region
  $region6: #{cond_mlp_forward.1} parent=0 // pred_check
    _
  $region7: #{cond_mlp_forward.1} parent=0 // pred_check_branch
    %17 = sbr.rel (0) target = $region9
  $region8: #{cond_mlp_forward.1} parent=0 // pred_region
    _
  $region9: #{cond_mlp_forward.1} parent=0 // pred_fallthru
    _
  // Predicated region
  $region10: #{cond_mlp_forward.1} parent=0 // pred_check
    _
  $region11: #{cond_mlp_forward.1} parent=0 // pred_check_branch
    %19 = sbr.rel (0) target = $region13
  $region12: #{cond_mlp_forward.1} parent=0 // pred_region
    _
  $region13: #{cond_mlp_forward.1} parent=0 // pred_fallthru
    _
  // Predicated region
  $region14: #{cond_mlp_forward.1} parent=0 // pred_check
    _
  $region15: #{cond_mlp_forward.1} parent=0 // pred_check_branch
    %21 = sbr.rel (0) target = $region17
  $region16: #{cond_mlp_forward.1} parent=0 // pred_region
    _
  $region17: #{cond_mlp_forward.1} parent=0 // pred_fallthru
    _
  // Predicated region
  $region18: #{cond_mlp_forward.1} parent=0 // pred_check
    _
  $region19: #{cond_mlp_forward.1} parent=0 // pred_check_branch
    %23 = sbr.rel (0) target = $region21
  $region20: #{cond_mlp_forward.1} parent=0 // pred_region
    _
  $region21: #{cond_mlp_forward.1} parent=0 // pred_fallthru
    _
  // Predicated region
  $region22: #{cond_mlp_forward.1} parent=0 // pred_check
    _
  $region23: #{cond_mlp_forward.1} parent=0 // pred_check_branch
    %25 = sbr.rel (0) target = $region25
  $region24: #{cond_mlp_forward.1} parent=0 // pred_region
    _
  $region25: #{cond_mlp_forward.1} parent=0 // pred_fallthru
    _
  // Predicated region
  $region26: #{cond_mlp_forward.1} parent=0 // pred_check
    _
  $region27: #{cond_mlp_forward.1} parent=0 // pred_check_branch
    %27 = sbr.rel (0) target = $region29
  $region28: #{cond_mlp_forward.1} parent=0 // pred_region
    _
  $region29: #{cond_mlp_forward.1} parent=0 // pred_fallthru
    _
  // Predicated region
  $region30: #{cond_mlp_forward.1} parent=0 // pred_check
    _
  $region31: #{cond_mlp_forward.1} parent=0 // pred_check_branch
    %29 = sbr.rel (0) target = $region33
  $region32: #{cond_mlp_forward.1} parent=0 // pred_region
    _
  $region33: #{cond_mlp_forward.1} parent=0 // pred_fallthru
    _
  // Predicated region
  $region34: #{cond_mlp_forward.1} parent=0 // pred_check
    _
  $region35: #{cond_mlp_forward.1} parent=0 // pred_check_branch
    %31 = sbr.rel (0) target = $region37
  $region36: #{cond_mlp_forward.1} parent=0 // pred_region
    _
  $region37: #{cond_mlp_forward.1} parent=0 // pred_fallthru
    _
  %p32 = scmp.eq.s32.totalorder 0, 0
  // Predicated region
  $region38: #{cond_mlp_forward.1} parent=0 // pred_check
    %p33 = pneg %p32
  $region39: #{cond_mlp_forward.1} parent=0 // pred_check_branch
    %35 = sbr.rel (%p33) target = $region41
  $region40: #{cond_mlp_forward.1} parent=0 // pred_region
    %v36 = vld [vmem:[%s0] sm:$0xff]
    %v37 = vld [vmem:[%s0 + $0x8] sm:$0xff]
    %v38 = vld [vmem:[%s1] sm:$0xff]
    %v39 = vld [vmem:[%s2] sm:$0x1]
    %v41 = vperm.slane %v39, 0
    %vm43 = vcmask 64512
    %v45 = vsel %vm43, %v36, 0
    %v48 = vsel %vm43, %v37, 0
    %50 = vmatpush.msra.mxu0 0.0
    %51 = vmatpush.msra.mxu0 0.0
    %52 = vmatpush.msra.mxu0 0.0
    %53 = vmatpush.msra.mxu0 0.0
    %54 = vmatpush.msra.mxu0 0.0
    %55 = vmatpush.msra.mxu0 0.0
    %56 = vmatpush.msra.mxu0 0.0
    %57 = vmatpush.msra.mxu0 0.0
    %58 = vmatpush.msra.mxu0 0.0
    %59 = vmatpush.msra.mxu0 0.0
    %60 = vmatpush.msra.mxu0 0.0
    %61 = vmatpush.msra.mxu0 0.0
    %62 = vmatpush.msra.mxu0 0.0
    %63 = vmatpush.msra.mxu0 0.0
    %64 = vmatpush.msra.mxu0 0.0
    %65 = vmatpush.msra.mxu0 %v38
    %66 = vmatmul.f32.gmra.mxu0 %v45
    %v67 = vpop.f32.mrf.mxu0
    %v68 = vadd.f32 %v41, %v67
    %69 = vmatmul.f32.gmra.mxu0 %v48
    %v70 = vpop.f32.mrf.mxu0
    %v71 = vadd.f32 %v41, %v70
    %72 = vdwg.mxu0
    %v73 = vmul.f32 %v68, 0.1
    %v74 = vmul.f32 %v71, 0.1
    %v75 = vmax.f32 %v68, %v73
    %v76 = vmax.f32 %v71, %v74
    %v77 = vld [vmem:[%s3] sm:$0xff]
    %v78 = vld [vmem:[%s3 + $0x8] sm:$0xff]
    %v79 = vld [vmem:[%s3 + $0x10] sm:$0xff]
    %v80 = vld [vmem:[%s3 + $0x18] sm:$0xff]
    %v81 = vld [vmem:[%s4] sm:$0x1]
    %v83 = vperm.slane %v81, 0
    %vm85 = vcmask 261120
    %v87 = vsel %vm85, %v75, 0
    %v90 = vsel %vm85, %v76, 0
    %92 = vmatpush.msra.mxu0 0.0
    %93 = vmatpush.msra.mxu0 0.0
    %94 = vmatpush.msra.mxu0 0.0
    %95 = vmatpush.msra.mxu0 0.0
    %96 = vmatpush.msra.mxu0 0.0
    %97 = vmatpush.msra.mxu0 0.0
    %98 = vmatpush.msra.mxu0 0.0
    %99 = vmatpush.msra.mxu0 0.0
    %100 = vmatpush.msra.mxu0 0.0
    %101 = vmatpush.msra.mxu0 0.0
    %102 = vmatpush.msra.mxu0 0.0
    %103 = vmatpush.msra.mxu0 0.0
    %104 = vmatpush.msra.mxu0 %v80
    %105 = vmatpush.msra.mxu0 %v79
    %106 = vmatpush.msra.mxu0 %v78
    %107 = vmatpush.msra.mxu0 %v77
    %108 = vmatmul.f32.gmra.mxu0 %v87
    %v109 = vpop.f32.mrf.mxu0
    %v110 = vadd.f32 %v83, %v109
    %111 = vmatmul.f32.gmra.mxu0 %v90
    %v112 = vpop.f32.mrf.mxu0
    %v113 = vadd.f32 %v83, %v112
    %114 = vdwg.mxu0
    %v115 = vmul.f32 %v110, 0.1
    %v116 = vmul.f32 %v113, 0.1
    %v117 = vmax.f32 %v110, %v115
    %v118 = vmax.f32 %v113, %v116
    %v119 = vld [vmem:[%s5] sm:$0xff]
    %v120 = vld [vmem:[%s5 + $0x8] sm:$0xff]
    %v121 = vld [vmem:[%s5 + $0x10] sm:$0xff]
    %v122 = vld [vmem:[%s5 + $0x18] sm:$0xff]
    %v123 = vld [vmem:[%s6] sm:$0x1]
    %v125 = vperm.slane %v123, 0
    %v128 = vsel %vm85, %v117, 0
    %v131 = vsel %vm85, %v118, 0
    %133 = vmatpush.msra.mxu0 0.0
    %134 = vmatpush.msra.mxu0 0.0
    %135 = vmatpush.msra.mxu0 0.0
    %136 = vmatpush.msra.mxu0 0.0
    %137 = vmatpush.msra.mxu0 0.0
    %138 = vmatpush.msra.mxu0 0.0
    %139 = vmatpush.msra.mxu0 0.0
    %140 = vmatpush.msra.mxu0 0.0
    %141 = vmatpush.msra.mxu0 0.0
    %142 = vmatpush.msra.mxu0 0.0
    %143 = vmatpush.msra.mxu0 0.0
    %144 = vmatpush.msra.mxu0 0.0
    %145 = vmatpush.msra.mxu0 %v122
    %146 = vmatpush.msra.mxu0 %v121
    %147 = vmatpush.msra.mxu0 %v120
    %148 = vmatpush.msra.mxu0 %v119
    %149 = vmatmul.f32.gmra.mxu0 %v128
    %v150 = vpop.f32.mrf.mxu0
    %v151 = vadd.f32 %v125, %v150
    %152 = vmatmul.f32.gmra.mxu0 %v131
    %v153 = vpop.f32.mrf.mxu0
    %v154 = vadd.f32 %v125, %v153
    %155 = vdwg.mxu0
    %v156 = vmul.f32 %v151, 0.1
    %v157 = vmul.f32 %v154, 0.1
    %v158 = vmax.f32 %v151, %v156
    %v159 = vmax.f32 %v154, %v157
    %160 = vst.msk [vmem:[#allocation2] sm:$0xff] %vm85, %v158
    %161 = vst.msk [vmem:[#allocation2 + $0x8] sm:$0xff] %vm85, %v159
  $region41: #{cond_mlp_forward.1} parent=0 // pred_fallthru
    _
  %v162 = vld [vmem:[#allocation2] sm:$0xff]
  %v163 = vld [vmem:[#allocation2 + $0x8] sm:$0xff]
  %v164 = vld [vmem:[%s7] sm:$0xff]
  %v165 = vld [vmem:[%s7 + $0x8] sm:$0xff]
  %v166 = vld [vmem:[%s7 + $0x10] sm:$0xff]
  %v167 = vld [vmem:[%s7 + $0x18] sm:$0xff]
  %v168 = vld [vmem:[%s8] sm:$0x1]
  %v170 = vperm.slane %v168, 0
  %vm172 = vcmask 261120
  %v174 = vsel %vm172, %v162, 0
  %v177 = vsel %vm172, %v163, 0
  %179 = vmatpush.msra.mxu0 0.0
  %180 = vmatpush.msra.mxu0 0.0
  %181 = vmatpush.msra.mxu0 0.0
  %182 = vmatpush.msra.mxu0 0.0
  %183 = vmatpush.msra.mxu0 0.0
  %184 = vmatpush.msra.mxu0 0.0
  %185 = vmatpush.msra.mxu0 0.0
  %186 = vmatpush.msra.mxu0 0.0
  %187 = vmatpush.msra.mxu0 0.0
  %188 = vmatpush.msra.mxu0 0.0
  %189 = vmatpush.msra.mxu0 0.0
  %190 = vmatpush.msra.mxu0 0.0
  %191 = vmatpush.msra.mxu0 %v167
  %192 = vmatpush.msra.mxu0 %v166
  %193 = vmatpush.msra.mxu0 %v165
  %194 = vmatpush.msra.mxu0 %v164
  %195 = vmatmul.f32.gmra.mxu0 %v174
  %v196 = vpop.f32.mrf.mxu0
  %v197 = vadd.f32 %v170, %v196
  %198 = vmatmul.f32.gmra.mxu0 %v177
  %v199 = vpop.f32.mrf.mxu0
  %v200 = vadd.f32 %v170, %v199
  %201 = vdwg.mxu0
  %202 = vst [vmem:[%s9] sm:$0xff] %v197
  %203 = vst [vmem:[%s9 + $0x8] sm:$0xff] %v200
  // Predicated region
  $region42: #{cond_mlp_forward.1} parent=0 // pred_check
    _
  $region43: #{cond_mlp_forward.1} parent=0 // pred_check_branch
    %205 = sbr.rel (0) target = $region45
  $region44: #{cond_mlp_forward.1} parent=0 // pred_region
    _
  $region45: #{cond_mlp_forward.1} parent=0 // pred_fallthru
    _
  // Predicated region
  $region46: #{cond_mlp_forward.1} parent=0 // pred_check
    _
  $region47: #{cond_mlp_forward.1} parent=0 // pred_check_branch
    %207 = sbr.rel (0) target = $region49
  $region48: #{cond_mlp_forward.1} parent=0 // pred_region
    _
  $region49: #{cond_mlp_forward.1} parent=0 // pred_fallthru
    _

</llo_original>
